<compile_context>
chip_gen: v7x
topology: tpu7x:2x2x1
jax: 0.10.0
libtpu: 0.0.40
codegen_flags: <defaults>
</compile_context>

<pallas_src>
import jax
import jax.numpy as jnp
from jax.experimental import pallas as pl
from jax.experimental.pallas import tpu as pltpu

IN_F, HID_F, OUT_F = 120, 84, 10        # fc2: 120 -> 84, fc3: 84 -> 10
MAX_TM = 1024                           # cap on the batch tile (multiple of 8)


def _round_up(n, m):
    return ((n + m - 1) // m) * m


def _choose_tile_m(batch):
    """Batch tile: multiple of 8, big enough to amortize per-step overhead,
    and >=2 grid steps for non-tiny batches (v7x megacore sharding)."""
    m8 = _round_up(batch, 8)
    if m8 <= 16:                        # tiny batch: single tile
        return m8
    half = _round_up(pl.cdiv(m8, 2), 8)
    return min(MAX_TM, half)


# ----------------------------------------------------------------------------
# Fused kernel: o = relu(x @ W2 + b2) @ W3 + b3   on one batch tile
# ----------------------------------------------------------------------------
def _head_kernel(x_ref, w2_ref, b2_ref, w3_ref, b3_ref, o_ref):
    cdt = w2_ref.dtype                                   # MXU operand dtype
    x = x_ref[...].astype(cdt)
    h = jnp.dot(x, w2_ref[...], preferred_element_type=jnp.float32)
    h = jnp.maximum(h + b2_ref[...], 0.0)                # fc2 bias + ReLU (f32)
    o = jnp.dot(h.astype(cdt), w3_ref[...],
                preferred_element_type=jnp.float32)
    o_ref[...] = (o + b3_ref[...]).astype(o_ref.dtype)   # fc3 bias


# ----------------------------------------------------------------------------
# One-time weight packing: transpose to (in, out); weights in MXU dtype,
# biases kept f32 (added post-accumulation).
# ----------------------------------------------------------------------------
def pack_params(params, compute_dtype=jnp.bfloat16):
    return {
        "w2": params["w2"].T.astype(compute_dtype),              # (120, 84)
        "b2": params["b2"].reshape(1, HID_F).astype(jnp.float32),
        "w3": params["w3"].T.astype(compute_dtype),              # (84, 10)
        "b3": params["b3"].reshape(1, OUT_F).astype(jnp.float32),
    }


# ----------------------------------------------------------------------------
# Forward wrapper
# ----------------------------------------------------------------------------
@jax.jit
def cnn_head_forward(x, packed):
    """x: (B, 120) -> (B, 10) float32."""
    B = x.shape[0]
    tm = _choose_tile_m(B)
    return pl.pallas_call(
        _head_kernel,
        out_shape=jax.ShapeDtypeStruct((B, OUT_F), jnp.float32),
        grid=(pl.cdiv(B, tm),),
        in_specs=[
            pl.BlockSpec((tm, IN_F), lambda i: (i, 0)),        # x batch tile
            pl.BlockSpec((IN_F, HID_F), lambda i: (0, 0)),     # W2 (resident)
            pl.BlockSpec((1, HID_F), lambda i: (0, 0)),        # b2
            pl.BlockSpec((HID_F, OUT_F), lambda i: (0, 0)),    # W3 (resident)
            pl.BlockSpec((1, OUT_F), lambda i: (0, 0)),        # b3
        ],
        out_specs=pl.BlockSpec((tm, OUT_F), lambda i: (i, 0)),
        compiler_params=pltpu.CompilerParams(
            dimension_semantics=("parallel",)),                # megacore on v7x
    )(x, packed["w2"], packed["b2"], packed["w3"], packed["b3"])


# ----------------------------------------------------------------------------
# Parameter init matching the PyTorch layer shapes (uniform +-1/sqrt(fan_in))
# ----------------------------------------------------------------------------
def init_params(key):
    ks = jax.random.split(key, 4)

    def uni(k, shape, fan_in):
        bound = 1.0 / jnp.sqrt(fan_in)
        return jax.random.uniform(k, shape, jnp.float32, -bound, bound)

    return {
        "w2": uni(ks[0], (HID_F, IN_F), IN_F),     # fc2.weight (84, 120)
        "b2": uni(ks[1], (HID_F,), IN_F),          # fc2.bias   (84,)
        "w3": uni(ks[2], (OUT_F, HID_F), HID_F),   # fc3.weight (10, 84)
        "b3": uni(ks[3], (OUT_F,), HID_F),         # fc3.bias   (10,)
    }


# ----------------------------------------------------------------------------
# Pure-JAX reference mirroring the PyTorch module (correctness check)
# ----------------------------------------------------------------------------
def ref_forward(x, params):
    h = jnp.maximum(x @ params["w2"].T + params["b2"], 0.0)
    return h @ params["w3"].T + params["b3"]


if __name__ == "__main__":
    key = jax.random.PRNGKey(0)
    kx, kx2, kp = jax.random.split(key, 3)

    params = init_params(kp)

    # --- exact-f32 path, small batch (B=2), single grid step ----------------
    x = jax.random.normal(kx, (2, IN_F), jnp.float32)
    ref = ref_forward(x, params)

    packed_f32 = pack_params(params, compute_dtype=jnp.float32)
    out_f32 = jax.block_until_ready(cnn_head_forward(x, packed_f32))
    assert out_f32.shape == (2, OUT_F), out_f32.shape
    assert jnp.allclose(out_f32, ref, rtol=1e-4, atol=1e-4), float(
        jnp.max(jnp.abs(out_f32 - ref)))

    # --- bf16-weight fast path (review-recommended on v6e/v7x) --------------
    packed_bf16 = pack_params(params)            # bf16 weights, f32 accumulate
    out_bf16 = jax.block_until_ready(cnn_head_forward(x, packed_bf16))
    assert out_bf16.shape == (2, OUT_F), out_bf16.shape
    assert jnp.allclose(out_bf16, ref, rtol=3e-2, atol=3e-2), float(
        jnp.max(jnp.abs(out_bf16 - ref)))

    # --- ragged multi-tile batch (exercises >1 grid step + masked edges) ----
    x2 = jax.random.normal(kx2, (37, IN_F), jnp.float32)
    ref2 = ref_forward(x2, params)
    out2 = jax.block_until_ready(cnn_head_forward(x2, packed_bf16))
    assert out2.shape == (37, OUT_F), out2.shape
    assert jnp.allclose(out2, ref2, rtol=3e-2, atol=3e-2), float(
        jnp.max(jnp.abs(out2 - ref2)))

    print("KERNEL_OK")
</pallas_src>

<mosaic_0001>
module attributes {stable_mosaic.version = 11 : i64} {
  func.func @_head_kernel(%arg0: i32, %arg1: memref<8x120xf32, #tpu.memory_space<vmem>>, %arg2: memref<120x84xf32, #tpu.memory_space<vmem>>, %arg3: memref<1x84xf32, #tpu.memory_space<vmem>>, %arg4: memref<84x10xf32, #tpu.memory_space<vmem>>, %arg5: memref<1x10xf32, #tpu.memory_space<vmem>>, %arg6: memref<8x10xf32, #tpu.memory_space<vmem>>) attributes {dimension_semantics = [#tpu.dimension_semantics<parallel>], iteration_bounds = array<i64: 1>, scalar_prefetch = 0 : i64, scratch_operands = 0 : i64, tpu.core_type = #tpu.core_type<tc>, window_params = [{transform_indices = @transform_0, window_bounds = array<i64: 8, 120>}, {pipeline_mode = #tpu.pipeline_mode<synchronous>, transform_indices = @transform_1, window_bounds = array<i64: 120, 84>}, {pipeline_mode = #tpu.pipeline_mode<synchronous>, transform_indices = @transform_2, window_bounds = array<i64: 1, 84>}, {pipeline_mode = #tpu.pipeline_mode<synchronous>, transform_indices = @transform_3, window_bounds = array<i64: 84, 10>}, {pipeline_mode = #tpu.pipeline_mode<synchronous>, transform_indices = @transform_4, window_bounds = array<i64: 1, 10>}, {transform_indices = @transform_5, window_bounds = array<i64: 8, 10>}]} {
    %c0 = arith.constant 0 : index
    %c0_0 = arith.constant 0 : index
    %0 = vector.load %arg1[%c0, %c0_0] : memref<8x120xf32, #tpu.memory_space<vmem>>, vector<8x120xf32>
    %c0_1 = arith.constant 0 : index
    %c0_2 = arith.constant 0 : index
    %1 = vector.load %arg2[%c0_1, %c0_2] : memref<120x84xf32, #tpu.memory_space<vmem>>, vector<120x84xf32>
    %cst = arith.constant dense<0.000000e+00> : vector<8x84xf32>
    %2 = tpu.matmul %0, %1, %cst {dimension_numbers = #tpu.dot_dimension_numbers<[1], [0], [0], [1], [0, 0, 1, 1], [], []>} : vector<8x120xf32>, vector<120x84xf32>, vector<8x84xf32> -> vector<8x84xf32>
    %c0_3 = arith.constant 0 : index
    %c0_4 = arith.constant 0 : index
    %3 = vector.load %arg3[%c0_3, %c0_4] : memref<1x84xf32, #tpu.memory_space<vmem>>, vector<1x84xf32>
    %4 = vector.broadcast %3 : vector<1x84xf32> to vector<8x84xf32>
    %5 = arith.addf %2, %4 : vector<8x84xf32>
    %cst_5 = arith.constant 0.000000e+00 : f32
    %6 = vector.broadcast %cst_5 : f32 to vector<8x84xf32>
    %7 = arith.maximumf %5, %6 : vector<8x84xf32>
    %c0_6 = arith.constant 0 : index
    %c0_7 = arith.constant 0 : index
    %8 = vector.load %arg4[%c0_6, %c0_7] : memref<84x10xf32, #tpu.memory_space<vmem>>, vector<84x10xf32>
    %cst_8 = arith.constant dense<0.000000e+00> : vector<8x10xf32>
    %9 = tpu.matmul %7, %8, %cst_8 {dimension_numbers = #tpu.dot_dimension_numbers<[1], [0], [0], [1], [0, 0, 1, 1], [], []>} : vector<8x84xf32>, vector<84x10xf32>, vector<8x10xf32> -> vector<8x10xf32>
    %c0_9 = arith.constant 0 : index
    %c0_10 = arith.constant 0 : index
    %10 = vector.load %arg5[%c0_9, %c0_10] : memref<1x10xf32, #tpu.memory_space<vmem>>, vector<1x10xf32>
    %11 = vector.broadcast %10 : vector<1x10xf32> to vector<8x10xf32>
    %12 = arith.addf %9, %11 : vector<8x10xf32>
    %c0_11 = arith.constant 0 : index
    %c0_12 = arith.constant 0 : index
    %13 = vector.load %arg6[%c0_11, %c0_12] : memref<8x10xf32, #tpu.memory_space<vmem>>, vector<8x10xf32>
    tpu.vector_store %arg6[%c0_11, %c0_12], %12 {strides = array<i32>} : memref<8x10xf32, #tpu.memory_space<vmem>>, vector<8x10xf32>,
    return
  }
  func.func @transform_0(%arg0: i32) -> (i32, i32) {
    %c0_i32 = arith.constant 0 : i32
    %c0_i32_0 = arith.constant 0 : i32
    return %arg0, %c0_i32 : i32, i32
  }
  func.func @transform_1(%arg0: i32) -> (i32, i32) {
    %c0_i32 = arith.constant 0 : i32
    %c0_i32_0 = arith.constant 0 : i32
    %c0_i32_1 = arith.constant 0 : i32
    return %c0_i32, %c0_i32_0 : i32, i32
  }
  func.func @transform_2(%arg0: i32) -> (i32, i32) {
    %c0_i32 = arith.constant 0 : i32
    %c0_i32_0 = arith.constant 0 : i32
    %c0_i32_1 = arith.constant 0 : i32
    return %c0_i32, %c0_i32_0 : i32, i32
  }
  func.func @transform_3(%arg0: i32) -> (i32, i32) {
    %c0_i32 = arith.constant 0 : i32
    %c0_i32_0 = arith.constant 0 : i32
    %c0_i32_1 = arith.constant 0 : i32
    return %c0_i32, %c0_i32_0 : i32, i32
  }
  func.func @transform_4(%arg0: i32) -> (i32, i32) {
    %c0_i32 = arith.constant 0 : i32
    %c0_i32_0 = arith.constant 0 : i32
    %c0_i32_1 = arith.constant 0 : i32
    return %c0_i32, %c0_i32_0 : i32, i32
  }
  func.func @transform_5(%arg0: i32) -> (i32, i32) {
    %c0_i32 = arith.constant 0 : i32
    %c0_i32_0 = arith.constant 0 : i32
    return %arg0, %c0_i32 : i32, i32
  }
}

</mosaic_0001>

<llo_original>
// kernel: cnn_head_forward.1
$region0: #{cnn_head_forward.1}
  #allocation0 [shape = 'u32[]', space=smem, size = 0x4, offset = 0x4, fixed_abs, tag = 'smem constant byte address 0x4 - core index']
  #allocation1 [shape = 'u32[144,128]{1,0:T(1,128)}', space=vmem, size = 0x12000, scoped, tag = 'internal scratch']
  %s0 = inlined_call_operand.vmem [shape: f32[2,120], index: 0, kind: input, shape index: {}]
  %s1 = inlined_call_operand.vmem [shape: f32[120,84], index: 1, kind: input, shape index: {}]
  %s2 = inlined_call_operand.vmem [shape: f32[1,84], index: 2, kind: input, shape index: {}]
  %s3 = inlined_call_operand.vmem [shape: f32[84,10], index: 3, kind: input, shape index: {}]
  %s4 = inlined_call_operand.vmem [shape: f32[1,10], index: 4, kind: input, shape index: {}]
  %s5 = inlined_call_operand.hbm [shape: f32[2,10], index: 5, kind: output, shape index: {}]
  %s6 = sld [smem:[#allocation0]]
  $region30: #{cnn_head_forward.1} parent=0
    _
  %s8 = ssub.s32 1, %s6
  %s9 = scalar_select 0, %s8, %s6
  $region1: #{cnn_head_forward.1} parent=0
    #allocation2 [shape = 'u8[4096]{0}', space=vmem, size = 0x1000, scoped, tag = 'output window, operand 0, single buffered']
    #allocation3 [shape = 's32[1]{0}', space=sflag, size = 0x4, scoped, tag = 'scoped memory for cnn_head_forward.1']
    %10 = vsyncpa [#allocation3], 0
    // Predicated region
    $region2: #{cnn_head_forward.1} parent=1 // pred_check
      _
    $region3: #{cnn_head_forward.1} parent=1 // pred_check_branch
      %12 = sbr.rel (0) target = $region5
    $region4: #{cnn_head_forward.1} parent=1 // pred_region
      _
    $region5: #{cnn_head_forward.1} parent=1 // pred_fallthru
      _
    // Predicated region
    $region6: #{cnn_head_forward.1} parent=1 // pred_check
      _
    $region7: #{cnn_head_forward.1} parent=1 // pred_check_branch
      %14 = sbr.rel (0) target = $region9
    $region8: #{cnn_head_forward.1} parent=1 // pred_region
      _
    $region9: #{cnn_head_forward.1} parent=1 // pred_fallthru
      _
    // Predicated region
    $region10: #{cnn_head_forward.1} parent=1 // pred_check
      _
    $region11: #{cnn_head_forward.1} parent=1 // pred_check_branch
      %16 = sbr.rel (0) target = $region13
    $region12: #{cnn_head_forward.1} parent=1 // pred_region
      _
    $region13: #{cnn_head_forward.1} parent=1 // pred_fallthru
      _
    // Predicated region
    $region14: #{cnn_head_forward.1} parent=1 // pred_check
      _
    $region15: #{cnn_head_forward.1} parent=1 // pred_check_branch
      %18 = sbr.rel (0) target = $region17
    $region16: #{cnn_head_forward.1} parent=1 // pred_region
      _
    $region17: #{cnn_head_forward.1} parent=1 // pred_fallthru
      _
    // Predicated region
    $region18: #{cnn_head_forward.1} parent=1 // pred_check
      _
    $region19: #{cnn_head_forward.1} parent=1 // pred_check_branch
      %20 = sbr.rel (0) target = $region21
    $region20: #{cnn_head_forward.1} parent=1 // pred_region
      _
    $region21: #{cnn_head_forward.1} parent=1 // pred_fallthru
      _
    %v21 = vld [vmem:[%s0] sm:$0xff]
    %v22 = vld [vmem:[%s1] sm:$0xff]
    %v23 = vld [vmem:[%s1 + $0x8] sm:$0xff]
    %v24 = vld [vmem:[%s1 + $0x10] sm:$0xff]
    %v25 = vld [vmem:[%s1 + $0x18] sm:$0xff]
    %v26 = vld [vmem:[%s1 + $0x20] sm:$0xff]
    %v27 = vld [vmem:[%s1 + $0x28] sm:$0xff]
    %v28 = vld [vmem:[%s1 + $0x30] sm:$0xff]
    %v29 = vld [vmem:[%s1 + $0x38] sm:$0xff]
    %v30 = vld [vmem:[%s1 + $0x40] sm:$0xff]
    %v31 = vld [vmem:[%s1 + $0x48] sm:$0xff]
    %v32 = vld [vmem:[%s1 + $0x50] sm:$0xff]
    %v33 = vld [vmem:[%s1 + $0x58] sm:$0xff]
    %v34 = vld [vmem:[%s1 + $0x60] sm:$0xff]
    %v35 = vld [vmem:[%s1 + $0x68] sm:$0xff]
    %v36 = vld [vmem:[%s1 + $0x70] sm:$0xff]
    %v37 = vld [vmem:[%s2] sm:$0x1]
    %v39 = vlaneseq
    %v40 = vshrl.u32 %v39, 7
    %v41 = vsub.s32 0, %v40
    %v42 = vrot.slane %v37, %v41
    %vm44 = vcmask 982016
    %v46 = vsel %vm44, %v21, 0
    %48 = vmatprep.subr.mxu0 0.0
    %49 = vmatpush1.msra.mxu0 %v22
    %50 = vmatprep.subr.mxu0 0.0
    %51 = vmatpush1.msra.mxu0 %v23
    %52 = vmatprep.subr.mxu0 0.0
    %53 = vmatpush1.msra.mxu0 %v24
    %54 = vmatprep.subr.mxu0 0.0
    %55 = vmatpush1.msra.mxu0 %v25
    %56 = vmatprep.subr.mxu0 0.0
    %57 = vmatpush1.msra.mxu0 %v26
    %58 = vmatprep.subr.mxu0 0.0
    %59 = vmatpush1.msra.mxu0 %v27
    %60 = vmatprep.subr.mxu0 0.0
    %61 = vmatpush1.msra.mxu0 %v28
    %62 = vmatprep.subr.mxu0 0.0
    %63 = vmatpush1.msra.mxu0 %v29
    %64 = vmatprep.subr.mxu0 0.0
    %65 = vmatpush1.msra.mxu0 %v30
    %66 = vmatprep.subr.mxu0 0.0
    %67 = vmatpush1.msra.mxu0 %v31
    %68 = vmatprep.subr.mxu0 0.0
    %69 = vmatpush1.msra.mxu0 %v32
    %70 = vmatprep.subr.mxu0 0.0
    %71 = vmatpush1.msra.mxu0 %v33
    %72 = vmatprep.subr.mxu0 0.0
    %73 = vmatpush1.msra.mxu0 %v34
    %74 = vmatprep.subr.mxu0 0.0
    %75 = vmatpush1.msra.mxu0 %v35
    %76 = vmatprep.subr.mxu0 0.0
    %77 = vmatpush1.msra.mxu0 %v36
    %78 = vmatprep.subr.mxu0 0.0
    %79 = vmatpush1.msra.mxu0 0.0
    %80 = vmatprep.subr.mxu0 0.0
    %81 = vmatpush1.msra.mxu0 0.0
    %82 = vmatprep.subr.mxu0 0.0
    %83 = vmatpush1.msra.mxu0 0.0
    %84 = vmatprep.subr.mxu0 0.0
    %85 = vmatpush1.msra.mxu0 0.0
    %86 = vmatprep.subr.mxu0 0.0
    %87 = vmatpush1.msra.mxu0 0.0
    %88 = vmatprep.subr.mxu0 0.0
    %89 = vmatpush1.msra.mxu0 0.0
    %90 = vmatprep.subr.mxu0 0.0
    %91 = vmatpush1.msra.mxu0 0.0
    %92 = vmatprep.subr.mxu0 0.0
    %93 = vmatpush1.msra.mxu0 0.0
    %94 = vmatprep.subr.mxu0 0.0
    %95 = vmatpush1.msra.mxu0 0.0
    %96 = vmatprep.subr.mxu0 0.0
    %97 = vmatpush1.msra.mxu0 0.0
    %98 = vmatprep.subr.mxu0 0.0
    %99 = vmatpush1.msra.mxu0 0.0
    %100 = vmatprep.subr.mxu0 0.0
    %101 = vmatpush1.msra.mxu0 0.0
    %102 = vmatprep.subr.mxu0 0.0
    %103 = vmatpush1.msra.mxu0 0.0
    %104 = vmatprep.subr.mxu0 0.0
    %105 = vmatpush1.msra.mxu0 0.0
    %106 = vmatprep.subr.mxu0 0.0
    %107 = vmatpush1.msra.mxu0 0.0
    %108 = vmatprep.subr.mxu0 0.0
    %109 = vmatpush1.msra.mxu0 0.0
    %110 = vmatprep.subr.mxu0 0.0
    %111 = vmatpush1.msra.mxu0 0.0
    %112 = vmatprep.mubr.f32.mxu0 0.0
    %113 = vmatmul.mubr.f32.gmra.mrb[0].mxu0 %v46
    %v114 = vpop.f32.mrb[0].mxu0
    %v115 = vadd.f32 %v42, %v114
    %v116 = vpop.f32.mrb[0].mxu0
    %117 = vdwg.mxu0
    %v118 = vmax.f32 %v115, 0.0
    %v119 = vld [vmem:[%s3] sm:$0xff]
    %v120 = vld [vmem:[%s3 + $0x8] sm:$0xff]
    %v121 = vld [vmem:[%s3 + $0x10] sm:$0xff]
    %v122 = vld [vmem:[%s3 + $0x18] sm:$0xff]
    %v123 = vld [vmem:[%s3 + $0x20] sm:$0xff]
    %v124 = vld [vmem:[%s3 + $0x28] sm:$0xff]
    %v125 = vld [vmem:[%s3 + $0x30] sm:$0xff]
    %v126 = vld [vmem:[%s3 + $0x38] sm:$0xff]
    %v127 = vld [vmem:[%s3 + $0x40] sm:$0xff]
    %v128 = vld [vmem:[%s3 + $0x48] sm:$0xff]
    %v129 = vld [vmem:[%s3 + $0x50] sm:$0xf]
    %v130 = vld [vmem:[%s4] sm:$0x1]
    %v132 = vlaneseq
    %v133 = vshrl.u32 %v132, 7
    %v134 = vsub.s32 0, %v133
    %v135 = vrot.slane %v130, %v134
    %vm137 = vcmask 687104
    %v139 = vsel %vm137, %v118, 0
    %vm141 = vcmask 1043456
    %v143 = vsel %vm141, %v129, 0
    %145 = vmatprep.subr.mxu0 0.0
    %146 = vmatpush1.msra.mxu0 %v119
    %147 = vmatprep.subr.mxu0 0.0
    %148 = vmatpush1.msra.mxu0 %v120
    %149 = vmatprep.subr.mxu0 0.0
    %150 = vmatpush1.msra.mxu0 %v121
    %151 = vmatprep.subr.mxu0 0.0
    %152 = vmatpush1.msra.mxu0 %v122
    %153 = vmatprep.subr.mxu0 0.0
    %154 = vmatpush1.msra.mxu0 %v123
    %155 = vmatprep.subr.mxu0 0.0
    %156 = vmatpush1.msra.mxu0 %v124
    %157 = vmatprep.subr.mxu0 0.0
    %158 = vmatpush1.msra.mxu0 %v125
    %159 = vmatprep.subr.mxu0 0.0
    %160 = vmatpush1.msra.mxu0 %v126
    %161 = vmatprep.subr.mxu0 0.0
    %162 = vmatpush1.msra.mxu0 %v127
    %163 = vmatprep.subr.mxu0 0.0
    %164 = vmatpush1.msra.mxu0 %v128
    %165 = vmatprep.subr.mxu0 0.0
    %166 = vmatpush1.msra.mxu0 %v143
    %167 = vmatprep.subr.mxu0 0.0
    %168 = vmatpush1.msra.mxu0 0.0
    %169 = vmatprep.subr.mxu0 0.0
    %170 = vmatpush1.msra.mxu0 0.0
    %171 = vmatprep.subr.mxu0 0.0
    %172 = vmatpush1.msra.mxu0 0.0
    %173 = vmatprep.subr.mxu0 0.0
    %174 = vmatpush1.msra.mxu0 0.0
    %175 = vmatprep.subr.mxu0 0.0
    %176 = vmatpush1.msra.mxu0 0.0
    %177 = vmatprep.subr.mxu0 0.0
    %178 = vmatpush1.msra.mxu0 0.0
    %179 = vmatprep.subr.mxu0 0.0
    %180 = vmatpush1.msra.mxu0 0.0
    %181 = vmatprep.subr.mxu0 0.0
    %182 = vmatpush1.msra.mxu0 0.0
    %183 = vmatprep.subr.mxu0 0.0
    %184 = vmatpush1.msra.mxu0 0.0
    %185 = vmatprep.subr.mxu0 0.0
    %186 = vmatpush1.msra.mxu0 0.0
    %187 = vmatprep.subr.mxu0 0.0
    %188 = vmatpush1.msra.mxu0 0.0
    %189 = vmatprep.subr.mxu0 0.0
    %190 = vmatpush1.msra.mxu0 0.0
    %191 = vmatprep.subr.mxu0 0.0
    %192 = vmatpush1.msra.mxu0 0.0
    %193 = vmatprep.subr.mxu0 0.0
    %194 = vmatpush1.msra.mxu0 0.0
    %195 = vmatprep.subr.mxu0 0.0
    %196 = vmatpush1.msra.mxu0 0.0
    %197 = vmatprep.subr.mxu0 0.0
    %198 = vmatpush1.msra.mxu0 0.0
    %199 = vmatprep.subr.mxu0 0.0
    %200 = vmatpush1.msra.mxu0 0.0
    %201 = vmatprep.subr.mxu0 0.0
    %202 = vmatpush1.msra.mxu0 0.0
    %203 = vmatprep.subr.mxu0 0.0
    %204 = vmatpush1.msra.mxu0 0.0
    %205 = vmatprep.subr.mxu0 0.0
    %206 = vmatpush1.msra.mxu0 0.0
    %207 = vmatprep.subr.mxu0 0.0
    %208 = vmatpush1.msra.mxu0 0.0
    %209 = vmatprep.mubr.f32.mxu0 0.0
    %210 = vmatmul.mubr.f32.gmra.mrb[0].mxu0 %v139
    %v211 = vpop.f32.mrb[0].mxu0
    %v212 = vadd.f32 %v135, %v211
    %v213 = vpop.f32.mrb[0].mxu0
    %214 = vdwg.mxu0
    %vm215 = vcmask 80896
    %216 = vst.msk [vmem:[#allocation2] sm:$0xff] %vm215, %v212
    // Predicated region
    $region22: #{cnn_head_forward.1} parent=1 // pred_check
      _
    $region23: #{cnn_head_forward.1} parent=1 // pred_check_branch
      %218 = sbr.rel (0) target = $region25
    $region24: #{cnn_head_forward.1} parent=1 // pred_region
      %s220 = ssub.s32 128, 32
      %221 = vsyncadd [#allocation3], %s220
      %s222 = sshll.u32 [#allocation2], 4
      %s223 = int_to_ptr.vmem [resolvable:$true] %s222
      %228 = dma.vmem_to_hbm [thread:$0]  %s223, 32, %s5, [#allocation3], 32, 32, 2
    $region25: #{cnn_head_forward.1} parent=1 // pred_fallthru
      _
    // Predicated region
    $region26: #{cnn_head_forward.1} parent=1 // pred_check
      _
    $region27: #{cnn_head_forward.1} parent=1 // pred_check_branch
      %230 = sbr.rel (0) target = $region29
    $region28: #{cnn_head_forward.1} parent=1 // pred_region
      %231 = dma.done [#allocation3], 128
    $region29: #{cnn_head_forward.1} parent=1 // pred_fallthru
      _
    %232 = vsyncpa [#allocation3], 1

</llo_original>
